<compile_context>
chip_gen: v7x
topology: tpu7x:2x2x1
jax: 0.10.0
libtpu: 0.0.40
codegen_flags: <defaults>
</compile_context>

<pallas_src>
import functools
import math
from typing import NamedTuple

import jax
import jax.numpy as jnp
from jax.experimental import pallas as pl
from jax.experimental.pallas import tpu as pltpu

_LANE = 128
_SUBLANE = 8
_NEG_BIG = -1e30


def _round_up(x: int, m: int) -> int:
    return ((x + m - 1) // m) * m


def _h_swish(x):
    # x * ReLU6(x + 3) / 6
    return x * (jnp.clip(x + 3.0, 0.0, 6.0) * (1.0 / 6.0))


def _branch_kernel(x_ref, w1_ref, b1_ref, w2_ref, b2_ref, o_ref, *,
                   branch_num: int, act: str):
    # Upcast to f32 inside the kernel (handles bf16/f16 storage cleanly).
    x = x_ref[...].astype(jnp.float32)
    w1 = w1_ref[...].astype(jnp.float32)
    b1 = b1_ref[...].astype(jnp.float32)
    w2 = w2_ref[...].astype(jnp.float32)
    b2 = b2_ref[...].astype(jnp.float32)

    h = jnp.dot(x, w1, preferred_element_type=jnp.float32) + b1
    h = _h_swish(h)
    logits = jnp.dot(h, w2, preferred_element_type=jnp.float32) + b2

    if act == "sigmoid":
        y = 1.0 / (1.0 + jnp.exp(-logits))
    elif act == "softmax":
        # Mask out padded columns so softmax only covers real branch outputs.
        col = jax.lax.broadcasted_iota(jnp.int32, logits.shape, 1)
        valid = col < branch_num
        masked = jnp.where(valid, logits, _NEG_BIG)
        m = jnp.max(masked, axis=1, keepdims=True)
        e = jnp.where(valid, jnp.exp(masked - m), 0.0)
        y = e / jnp.sum(e, axis=1, keepdims=True)
    else:  # "none": training-mode logits (no activation)
        y = logits
    o_ref[...] = y.astype(o_ref.dtype)


def classifier_branch(x, w1, b1, w2, b2, *, branch_num: int, act: str,
                      vmem_budget_bytes: int = 8 * 1024 * 1024):
    """Fused Linear -> h_swish -> Linear -> activation for one attribute."""
    n, f1 = x.shape
    f1w, f2 = w1.shape
    assert f1w == f1 and w2.shape[0] == f2 and w2.shape[1] == branch_num

    f1p = _round_up(f1, _LANE)
    f2p = _round_up(f2, _LANE)
    bp = _round_up(max(branch_num, 1), _LANE)
    np_ = _round_up(n, _SUBLANE)

    dtype = x.dtype
    itemsize = jnp.dtype(dtype).itemsize

    xp = jnp.zeros((np_, f1p), dtype).at[:n, :f1].set(x)
    w1p = jnp.zeros((f1p, f2p), dtype).at[:f1, :f2].set(w1)
    b1p = jnp.zeros((1, f2p), dtype).at[0, :f2].set(b1)
    w2p = jnp.zeros((f2p, bp), dtype).at[:f2, :branch_num].set(w2)
    b2p = jnp.zeros((1, bp), dtype).at[0, :branch_num].set(b2)

    kernel = functools.partial(_branch_kernel, branch_num=branch_num, act=act)

    # Rough resident footprint if we run the whole thing as one block (f32 work set).
    single_block_bytes = (
        xp.size + w1p.size + b1p.size + w2p.size + b2p.size
        + np_ * f2p + np_ * bp) * 4

    if single_block_bytes <= vmem_budget_bytes:
        # Small input (the test shape): single whole-array VMEM block, no grid.
        out = pl.pallas_call(
            kernel,
            out_shape=jax.ShapeDtypeStruct((np_, bp), dtype),
            in_specs=[pl.BlockSpec(memory_space=pltpu.MemorySpace.VMEM)] * 5,
            out_specs=pl.BlockSpec(memory_space=pltpu.MemorySpace.VMEM),
        )(xp, w1p, b1p, w2p, b2p)
        return out[:n, :branch_num]

    # Large batch: tile over rows with big lane-dense tiles; weights resident.
    weight_bytes = (w1p.size + b1p.size + w2p.size + b2p.size) * itemsize
    per_row_bytes = (f1p + f2p + bp) * 4  # f32 working set per row
    rows_budget = max(
        _SUBLANE,
        (vmem_budget_bytes // 2 - 2 * weight_bytes) // max(per_row_bytes, 1))
    tile_n = max(_SUBLANE, min(np_, (rows_budget // _SUBLANE) * _SUBLANE))
    np2 = _round_up(np_, tile_n)
    if np2 != np_:
        xp = jnp.zeros((np2, f1p), dtype).at[:n, :f1].set(x)
    grid = (np2 // tile_n,)

    vmem_need = (2 * (tile_n * (f1p + bp)) * itemsize
                 + tile_n * f2p * 4 + 2 * weight_bytes)
    vmem_limit = int(min(max(2 * vmem_need, 16 * 1024 * 1024), 96 * 1024 * 1024))

    out = pl.pallas_call(
        kernel,
        out_shape=jax.ShapeDtypeStruct((np2, bp), dtype),
        grid_spec=pltpu.PrefetchScalarGridSpec(
            num_scalar_prefetch=0,
            grid=grid,
            in_specs=[
                pl.BlockSpec((tile_n, f1p), lambda i: (i, 0)),
                pl.BlockSpec((f1p, f2p), lambda i: (0, 0)),
                pl.BlockSpec((1, f2p), lambda i: (0, 0)),
                pl.BlockSpec((f2p, bp), lambda i: (0, 0)),
                pl.BlockSpec((1, bp), lambda i: (0, 0)),
            ],
            out_specs=pl.BlockSpec((tile_n, bp), lambda i: (i, 0)),
        ),
        compiler_params=pltpu.CompilerParams(
            dimension_semantics=("parallel",),
            vmem_limit_bytes=vmem_limit,
        ),
    )(xp, w1p, b1p, w2p, b2p)
    return out[:n, :branch_num]


class Attr(NamedTuple):
    branch_num: int


class ClassifierNew:
    """JAX/Pallas port of the PyTorch ClassifierNew forward pass."""

    def __init__(self, params, attrs, training=False):
        # params: list of (w1, b1, w2, b2) per attribute, w stored (in, out).
        self.params = params
        self.attrs = attrs
        self.training = training

    def __call__(self, x):
        result = []
        for attr, (w1, b1, w2, b2) in zip(self.attrs, self.params):
            if self.training:
                # TODO(synk): training-mode nn.Dropout not implemented
                # (eval forward; dropout is identity and no activation here).
                act = "none"
            else:
                act = "sigmoid" if attr.branch_num == 1 else "softmax"
            y = classifier_branch(x, w1, b1, w2, b2,
                                  branch_num=attr.branch_num, act=act)
            result.append(y)
        return tuple(result)


def _ref_forward(x, params, attrs):
    outs = []
    for attr, (w1, b1, w2, b2) in zip(attrs, params):
        h = x @ w1 + b1
        h = h * (jnp.clip(h + 3.0, 0.0, 6.0) / 6.0)
        y = h @ w2 + b2
        if attr.branch_num == 1:
            y = jax.nn.sigmoid(y)
        else:
            y = jax.nn.softmax(y, axis=1)
        outs.append(y)
    return tuple(outs)


if __name__ == "__main__":
    key = jax.random.PRNGKey(0)
    batch, fc1, fc2 = 2, 32, 32
    attrs = [Attr(branch_num=1), Attr(branch_num=3)]

    params = []
    for attr in attrs:
        key, k1, k2, k3, k4 = jax.random.split(key, 5)
        w1 = jax.random.normal(k1, (fc1, fc2), jnp.float32) / math.sqrt(fc1)
        b1 = jax.random.normal(k2, (fc2,), jnp.float32) * 0.1
        w2 = jax.random.normal(k3, (fc2, attr.branch_num), jnp.float32) / math.sqrt(fc2)
        b2 = jax.random.normal(k4, (attr.branch_num,), jnp.float32) * 0.1
        params.append((w1, b1, w2, b2))

    key, kx = jax.random.split(key)
    x = jax.random.normal(kx, (batch, fc1), jnp.float32)

    model = ClassifierNew(params, attrs, training=False)
    outs = model(x)
    outs = jax.block_until_ready(outs)

    refs = _ref_forward(x, params, attrs)
    assert len(outs) == len(refs)
    for y, yr, attr in zip(outs, refs, attrs):
        assert y.shape == (batch, attr.branch_num)
        assert y.dtype == x.dtype
        assert jnp.allclose(y, yr, atol=1e-5, rtol=1e-5)
    print("KERNEL_OK")
</pallas_src>

<mosaic_0001>
module attributes {stable_mosaic.version = 11 : i64} {
  func.func @_branch_kernel(%arg0: memref<8x128xf32, #tpu.memory_space<vmem>>, %arg1: memref<128x128xf32, #tpu.memory_space<vmem>>, %arg2: memref<1x128xf32, #tpu.memory_space<vmem>>, %arg3: memref<128x128xf32, #tpu.memory_space<vmem>>, %arg4: memref<1x128xf32, #tpu.memory_space<vmem>>, %arg5: memref<8x128xf32, #tpu.memory_space<vmem>>) attributes {dimension_semantics = [], scalar_prefetch = 0 : i64, scratch_operands = 0 : i64, tpu.core_type = #tpu.core_type<tc>} {
    %c0 = arith.constant 0 : index
    %c0_0 = arith.constant 0 : index
    %0 = vector.load %arg0[%c0, %c0_0] : memref<8x128xf32, #tpu.memory_space<vmem>>, vector<8x128xf32>
    %c0_1 = arith.constant 0 : index
    %c0_2 = arith.constant 0 : index
    %1 = vector.load %arg1[%c0_1, %c0_2] : memref<128x128xf32, #tpu.memory_space<vmem>>, vector<128x128xf32>
    %c0_3 = arith.constant 0 : index
    %c0_4 = arith.constant 0 : index
    %2 = vector.load %arg2[%c0_3, %c0_4] : memref<1x128xf32, #tpu.memory_space<vmem>>, vector<1x128xf32>
    %c0_5 = arith.constant 0 : index
    %c0_6 = arith.constant 0 : index
    %3 = vector.load %arg3[%c0_5, %c0_6] : memref<128x128xf32, #tpu.memory_space<vmem>>, vector<128x128xf32>
    %c0_7 = arith.constant 0 : index
    %c0_8 = arith.constant 0 : index
    %4 = vector.load %arg4[%c0_7, %c0_8] : memref<1x128xf32, #tpu.memory_space<vmem>>, vector<1x128xf32>
    %cst = arith.constant dense<0.000000e+00> : vector<8x128xf32>
    %5 = tpu.matmul %0, %1, %cst {dimension_numbers = #tpu.dot_dimension_numbers<[1], [0], [0], [1], [0, 0, 1, 1], [], []>} : vector<8x128xf32>, vector<128x128xf32>, vector<8x128xf32> -> vector<8x128xf32>
    %6 = vector.broadcast %2 : vector<1x128xf32> to vector<8x128xf32>
    %7 = arith.addf %5, %6 : vector<8x128xf32>
    %cst_9 = arith.constant 3.000000e+00 : f32
    %8 = vector.broadcast %cst_9 : f32 to vector<8x128xf32>
    %9 = arith.addf %7, %8 : vector<8x128xf32>
    %cst_10 = arith.constant 0.000000e+00 : f32
    %cst_11 = arith.constant 6.000000e+00 : f32
    %10 = vector.broadcast %cst_10 : f32 to vector<8x128xf32>
    %11 = arith.maximumf %10, %9 : vector<8x128xf32>
    %12 = vector.broadcast %cst_11 : f32 to vector<8x128xf32>
    %13 = arith.minimumf %12, %11 : vector<8x128xf32>
    %cst_12 = arith.constant 0.166666672 : f32
    %14 = vector.broadcast %cst_12 : f32 to vector<8x128xf32>
    %15 = arith.mulf %13, %14 : vector<8x128xf32>
    %16 = arith.mulf %7, %15 : vector<8x128xf32>
    %cst_13 = arith.constant dense<0.000000e+00> : vector<8x128xf32>
    %17 = tpu.matmul %16, %3, %cst_13 {dimension_numbers = #tpu.dot_dimension_numbers<[1], [0], [0], [1], [0, 0, 1, 1], [], []>} : vector<8x128xf32>, vector<128x128xf32>, vector<8x128xf32> -> vector<8x128xf32>
    %18 = vector.broadcast %4 : vector<1x128xf32> to vector<8x128xf32>
    %19 = arith.addf %17, %18 : vector<8x128xf32>
    %cst_14 = arith.constant 0.000000e+00 : f32
    %20 = vector.broadcast %cst_14 : f32 to vector<8x128xf32>
    %21 = arith.subf %20, %19 : vector<8x128xf32>
    %22 = math.exp %21 : vector<8x128xf32>
    %cst_15 = arith.constant 1.000000e+00 : f32
    %23 = vector.broadcast %cst_15 : f32 to vector<8x128xf32>
    %24 = arith.addf %23, %22 : vector<8x128xf32>
    %cst_16 = arith.constant 1.000000e+00 : f32
    %25 = vector.broadcast %cst_16 : f32 to vector<8x128xf32>
    %26 = arith.divf %25, %24 : vector<8x128xf32>
    %c0_17 = arith.constant 0 : index
    %c0_18 = arith.constant 0 : index
    %27 = vector.load %arg5[%c0_17, %c0_18] : memref<8x128xf32, #tpu.memory_space<vmem>>, vector<8x128xf32>
    tpu.vector_store %arg5[%c0_17, %c0_18], %26 {strides = array<i32>} : memref<8x128xf32, #tpu.memory_space<vmem>>, vector<8x128xf32>,
    return
  }
}

</mosaic_0001>

<llo_original>
// kernel: tpu_custom_call.1
$region0: #{tpu_custom_call.1}
  #allocation0 [shape = 'u32[]', space=smem, size = 0x4, offset = 0x4, fixed_abs, tag = 'smem constant byte address 0x4 - core index']
  #allocation1 [shape = 'u32[144,128]{1,0:T(1,128)}', space=vmem, size = 0x12000, scoped, tag = 'internal scratch']
  %s0 = inlined_call_operand.hbm [shape: f32[8,128], index: 0, kind: input, shape index: {}]
  %s1 = inlined_call_operand.hbm [shape: f32[128,128], index: 1, kind: input, shape index: {}]
  %s2 = inlined_call_operand.vmem [shape: f32[1,128], index: 2, kind: input, shape index: {}]
  %s3 = inlined_call_operand.hbm [shape: f32[128,128], index: 3, kind: input, shape index: {}]
  %s4 = inlined_call_operand.vmem [shape: f32[1,128], index: 4, kind: input, shape index: {}]
  %s5 = inlined_call_operand.hbm [shape: f32[8,128], index: 5, kind: output, shape index: {}]
  %s6 = sld [smem:[#allocation0]]
  $region42: #{tpu_custom_call.1} parent=0
    _
  %s8 = ssub.s32 1, %s6
  %s9 = scalar_select 0, %s8, %s6
  $region1: #{tpu_custom_call.1} parent=0
    #allocation2 [shape = 'u8[4096]{0}', space=vmem, size = 0x1000, scoped, tag = 'input window, operand 0, single buffered']
    #allocation3 [shape = 's32[1]{0}', space=sflag, size = 0x4, scoped, tag = 'scoped memory for tpu_custom_call.1']
    #allocation4 [shape = 's32[1]{0}', space=sflag, size = 0x4, scoped, tag = 'scoped memory for tpu_custom_call.1']
    #allocation5 [shape = 'u8[65536]{0}', space=vmem, size = 0x10000, scoped, tag = 'input window, operand 1, single buffered']
    #allocation6 [shape = 's32[1]{0}', space=sflag, size = 0x4, scoped, tag = 'scoped memory for tpu_custom_call.1']
    #allocation7 [shape = 'u8[65536]{0}', space=vmem, size = 0x10000, scoped, tag = 'input window, operand 3, single buffered']
    #allocation8 [shape = 'u8[4096]{0}', space=vmem, size = 0x1000, scoped, tag = 'output window, operand 0, single buffered']
    %10 = vsyncpa [#allocation3], 0
    %11 = vsyncpa [#allocation6], 0
    %12 = vsyncpa [#allocation4], 0
    // Predicated region
    $region2: #{tpu_custom_call.1} parent=1 // pred_check
      _
    $region3: #{tpu_custom_call.1} parent=1 // pred_check_branch
      %14 = sbr.rel (0) target = $region5
    $region4: #{tpu_custom_call.1} parent=1 // pred_region
      %s16 = ssub.s32 128, 128
      %17 = vsyncadd [#allocation3], %s16
      %s19 = sshll.u32 [#allocation2], 4
      %s20 = int_to_ptr.vmem [resolvable:$true] %s19
      %22 = dma.hbm_to_vmem [thread:$0]  %s0, 128, %s20, [#allocation3]
    $region5: #{tpu_custom_call.1} parent=1 // pred_fallthru
      _
    // Predicated region
    $region6: #{tpu_custom_call.1} parent=1 // pred_check
      _
    $region7: #{tpu_custom_call.1} parent=1 // pred_check_branch
      %24 = sbr.rel (0) target = $region9
    $region8: #{tpu_custom_call.1} parent=1 // pred_region
      %s26 = ssub.s32 2048, 2048
      %27 = vsyncadd [#allocation6], %s26
      %s28 = sshll.u32 [#allocation5], 4
      %s29 = int_to_ptr.vmem [resolvable:$true] %s28
      %34 = dma.hbm_to_vmem [thread:$0]  %s1, 2048, %s29, [#allocation6], 128, 128, 8
    $region9: #{tpu_custom_call.1} parent=1 // pred_fallthru
      _
    // Predicated region
    $region10: #{tpu_custom_call.1} parent=1 // pred_check
      _
    $region11: #{tpu_custom_call.1} parent=1 // pred_check_branch
      %36 = sbr.rel (0) target = $region13
    $region12: #{tpu_custom_call.1} parent=1 // pred_region
      _
    $region13: #{tpu_custom_call.1} parent=1 // pred_fallthru
      _
    // Predicated region
    $region14: #{tpu_custom_call.1} parent=1 // pred_check
      _
    $region15: #{tpu_custom_call.1} parent=1 // pred_check_branch
      %38 = sbr.rel (0) target = $region17
    $region16: #{tpu_custom_call.1} parent=1 // pred_region
      %s40 = ssub.s32 2048, 2048
      %41 = vsyncadd [#allocation6], %s40
      %s42 = sshll.u32 [#allocation7], 4
      %s43 = int_to_ptr.vmem [resolvable:$true] %s42
      %48 = dma.hbm_to_vmem [thread:$0]  %s3, 2048, %s43, [#allocation6], 128, 128, 8
    $region17: #{tpu_custom_call.1} parent=1 // pred_fallthru
      _
    // Predicated region
    $region18: #{tpu_custom_call.1} parent=1 // pred_check
      _
    $region19: #{tpu_custom_call.1} parent=1 // pred_check_branch
      %50 = sbr.rel (0) target = $region21
    $region20: #{tpu_custom_call.1} parent=1 // pred_region
      _
    $region21: #{tpu_custom_call.1} parent=1 // pred_fallthru
      _
    // Predicated region
    $region22: #{tpu_custom_call.1} parent=1 // pred_check
      _
    $region23: #{tpu_custom_call.1} parent=1 // pred_check_branch
      %52 = sbr.rel (0) target = $region25
    $region24: #{tpu_custom_call.1} parent=1 // pred_region
      %53 = dma.done [#allocation3], 128
    $region25: #{tpu_custom_call.1} parent=1 // pred_fallthru
      _
    // Predicated region
    $region26: #{tpu_custom_call.1} parent=1 // pred_check
      _
    $region27: #{tpu_custom_call.1} parent=1 // pred_check_branch
      %55 = sbr.rel (0) target = $region29
    $region28: #{tpu_custom_call.1} parent=1 // pred_region
      %56 = dma.done [#allocation6], 2048
    $region29: #{tpu_custom_call.1} parent=1 // pred_fallthru
      _
    // Predicated region
    $region30: #{tpu_custom_call.1} parent=1 // pred_check
      _
    $region31: #{tpu_custom_call.1} parent=1 // pred_check_branch
      %58 = sbr.rel (0) target = $region33
    $region32: #{tpu_custom_call.1} parent=1 // pred_region
      %59 = dma.done [#allocation6], 2048
    $region33: #{tpu_custom_call.1} parent=1 // pred_fallthru
      _
    %v60 = vld [vmem:[#allocation2] sm:$0xff]
    %v61 = vld [vmem:[#allocation5] sm:$0xff]
    %v62 = vld [vmem:[#allocation5 + $0x8] sm:$0xff]
    %v63 = vld [vmem:[#allocation5 + $0x10] sm:$0xff]
    %v64 = vld [vmem:[#allocation5 + $0x18] sm:$0xff]
    %v65 = vld [vmem:[#allocation5 + $0x20] sm:$0xff]
    %v66 = vld [vmem:[#allocation5 + $0x28] sm:$0xff]
    %v67 = vld [vmem:[#allocation5 + $0x30] sm:$0xff]
    %v68 = vld [vmem:[#allocation5 + $0x38] sm:$0xff]
    %v69 = vld [vmem:[#allocation5 + $0x40] sm:$0xff]
    %v70 = vld [vmem:[#allocation5 + $0x48] sm:$0xff]
    %v71 = vld [vmem:[#allocation5 + $0x50] sm:$0xff]
    %v72 = vld [vmem:[#allocation5 + $0x58] sm:$0xff]
    %v73 = vld [vmem:[#allocation5 + $0x60] sm:$0xff]
    %v74 = vld [vmem:[#allocation5 + $0x68] sm:$0xff]
    %v75 = vld [vmem:[#allocation5 + $0x70] sm:$0xff]
    %v76 = vld [vmem:[#allocation5 + $0x78] sm:$0xff]
    %v77 = vld [vmem:[%s2] sm:$0x1]
    %v78 = vld [vmem:[#allocation7] sm:$0xff]
    %v79 = vld [vmem:[#allocation7 + $0x8] sm:$0xff]
    %v80 = vld [vmem:[#allocation7 + $0x10] sm:$0xff]
    %v81 = vld [vmem:[#allocation7 + $0x18] sm:$0xff]
    %v82 = vld [vmem:[#allocation7 + $0x20] sm:$0xff]
    %v83 = vld [vmem:[#allocation7 + $0x28] sm:$0xff]
    %v84 = vld [vmem:[#allocation7 + $0x30] sm:$0xff]
    %v85 = vld [vmem:[#allocation7 + $0x38] sm:$0xff]
    %v86 = vld [vmem:[#allocation7 + $0x40] sm:$0xff]
    %v87 = vld [vmem:[#allocation7 + $0x48] sm:$0xff]
    %v88 = vld [vmem:[#allocation7 + $0x50] sm:$0xff]
    %v89 = vld [vmem:[#allocation7 + $0x58] sm:$0xff]
    %v90 = vld [vmem:[#allocation7 + $0x60] sm:$0xff]
    %v91 = vld [vmem:[#allocation7 + $0x68] sm:$0xff]
    %v92 = vld [vmem:[#allocation7 + $0x70] sm:$0xff]
    %v93 = vld [vmem:[#allocation7 + $0x78] sm:$0xff]
    %v94 = vld [vmem:[%s4] sm:$0x1]
    %v96 = vlaneseq
    %v97 = vshrl.u32 %v96, 7
    %v98 = vsub.s32 0, %v97
    %v99 = vrot.slane %v77, %v98
    %101 = vmatprep.subr.mxu0 0.0
    %102 = vmatpush1.msra.mxu0 %v61
    %103 = vmatprep.subr.mxu0 0.0
    %104 = vmatpush1.msra.mxu0 %v62
    %105 = vmatprep.subr.mxu0 0.0
    %106 = vmatpush1.msra.mxu0 %v63
    %107 = vmatprep.subr.mxu0 0.0
    %108 = vmatpush1.msra.mxu0 %v64
    %109 = vmatprep.subr.mxu0 0.0
    %110 = vmatpush1.msra.mxu0 %v65
    %111 = vmatprep.subr.mxu0 0.0
    %112 = vmatpush1.msra.mxu0 %v66
    %113 = vmatprep.subr.mxu0 0.0
    %114 = vmatpush1.msra.mxu0 %v67
    %115 = vmatprep.subr.mxu0 0.0
    %116 = vmatpush1.msra.mxu0 %v68
    %117 = vmatprep.subr.mxu0 0.0
    %118 = vmatpush1.msra.mxu0 %v69
    %119 = vmatprep.subr.mxu0 0.0
    %120 = vmatpush1.msra.mxu0 %v70
    %121 = vmatprep.subr.mxu0 0.0
    %122 = vmatpush1.msra.mxu0 %v71
    %123 = vmatprep.subr.mxu0 0.0
    %124 = vmatpush1.msra.mxu0 %v72
    %125 = vmatprep.subr.mxu0 0.0
    %126 = vmatpush1.msra.mxu0 %v73
    %127 = vmatprep.subr.mxu0 0.0
    %128 = vmatpush1.msra.mxu0 %v74
    %129 = vmatprep.subr.mxu0 0.0
    %130 = vmatpush1.msra.mxu0 %v75
    %131 = vmatprep.subr.mxu0 0.0
    %132 = vmatpush1.msra.mxu0 %v76
    %133 = vmatprep.subr.mxu0 0.0
    %134 = vmatpush1.msra.mxu0 0.0
    %135 = vmatprep.subr.mxu0 0.0
    %136 = vmatpush1.msra.mxu0 0.0
    %137 = vmatprep.subr.mxu0 0.0
    %138 = vmatpush1.msra.mxu0 0.0
    %139 = vmatprep.subr.mxu0 0.0
    %140 = vmatpush1.msra.mxu0 0.0
    %141 = vmatprep.subr.mxu0 0.0
    %142 = vmatpush1.msra.mxu0 0.0
    %143 = vmatprep.subr.mxu0 0.0
    %144 = vmatpush1.msra.mxu0 0.0
    %145 = vmatprep.subr.mxu0 0.0
    %146 = vmatpush1.msra.mxu0 0.0
    %147 = vmatprep.subr.mxu0 0.0
    %148 = vmatpush1.msra.mxu0 0.0
    %149 = vmatprep.subr.mxu0 0.0
    %150 = vmatpush1.msra.mxu0 0.0
    %151 = vmatprep.subr.mxu0 0.0
    %152 = vmatpush1.msra.mxu0 0.0
    %153 = vmatprep.subr.mxu0 0.0
    %154 = vmatpush1.msra.mxu0 0.0
    %155 = vmatprep.subr.mxu0 0.0
    %156 = vmatpush1.msra.mxu0 0.0
    %157 = vmatprep.subr.mxu0 0.0
    %158 = vmatpush1.msra.mxu0 0.0
    %159 = vmatprep.subr.mxu0 0.0
    %160 = vmatpush1.msra.mxu0 0.0
    %161 = vmatprep.subr.mxu0 0.0
    %162 = vmatpush1.msra.mxu0 0.0
    %163 = vmatprep.subr.mxu0 0.0
    %164 = vmatpush1.msra.mxu0 0.0
    %165 = vmatprep.mubr.f32.mxu0 0.0
    %166 = vmatmul.mubr.f32.gmra.mrb[0].mxu0 %v60
    %v167 = vpop.f32.mrb[0].mxu0
    %v168 = vadd.f32 %v99, %v167
    %v169 = vpop.f32.mrb[0].mxu0
    %170 = vdwg.mxu0
    %v171 = vadd.f32 %v168, 3.0
    %v172 = vmax.f32 %v171, 0.0
    %v173 = vmin.f32 %v172, 6.0
    %v174 = vmul.f32 %v173, 0.16666667
    %v175 = vmul.f32 %v168, %v174
    %v177 = vlaneseq
    %v178 = vshrl.u32 %v177, 7
    %v179 = vsub.s32 0, %v178
    %v180 = vrot.slane %v94, %v179
    %182 = vmatprep.subr.mxu0 0.0
    %183 = vmatpush1.msra.mxu0 %v78
    %184 = vmatprep.subr.mxu0 0.0
    %185 = vmatpush1.msra.mxu0 %v79
    %186 = vmatprep.subr.mxu0 0.0
    %187 = vmatpush1.msra.mxu0 %v80
    %188 = vmatprep.subr.mxu0 0.0
    %189 = vmatpush1.msra.mxu0 %v81
    %190 = vmatprep.subr.mxu0 0.0
    %191 = vmatpush1.msra.mxu0 %v82
    %192 = vmatprep.subr.mxu0 0.0
    %193 = vmatpush1.msra.mxu0 %v83
    %194 = vmatprep.subr.mxu0 0.0
    %195 = vmatpush1.msra.mxu0 %v84
    %196 = vmatprep.subr.mxu0 0.0
    %197 = vmatpush1.msra.mxu0 %v85
    %198 = vmatprep.subr.mxu0 0.0
    %199 = vmatpush1.msra.mxu0 %v86
    %200 = vmatprep.subr.mxu0 0.0
    %201 = vmatpush1.msra.mxu0 %v87
    %202 = vmatprep.subr.mxu0 0.0
    %203 = vmatpush1.msra.mxu0 %v88
    %204 = vmatprep.subr.mxu0 0.0
    %205 = vmatpush1.msra.mxu0 %v89
    %206 = vmatprep.subr.mxu0 0.0
    %207 = vmatpush1.msra.mxu0 %v90
    %208 = vmatprep.subr.mxu0 0.0
    %209 = vmatpush1.msra.mxu0 %v91
    %210 = vmatprep.subr.mxu0 0.0
    %211 = vmatpush1.msra.mxu0 %v92
    %212 = vmatprep.subr.mxu0 0.0
    %213 = vmatpush1.msra.mxu0 %v93
    %214 = vmatprep.subr.mxu0 0.0
    %215 = vmatpush1.msra.mxu0 0.0
    %216 = vmatprep.subr.mxu0 0.0
    %217 = vmatpush1.msra.mxu0 0.0
    %218 = vmatprep.subr.mxu0 0.0
    %219 = vmatpush1.msra.mxu0 0.0
    %220 = vmatprep.subr.mxu0 0.0
    %221 = vmatpush1.msra.mxu0 0.0
    %222 = vmatprep.subr.mxu0 0.0
    %223 = vmatpush1.msra.mxu0 0.0
    %224 = vmatprep.subr.mxu0 0.0
    %225 = vmatpush1.msra.mxu0 0.0
    %226 = vmatprep.subr.mxu0 0.0
    %227 = vmatpush1.msra.mxu0 0.0
    %228 = vmatprep.subr.mxu0 0.0
    %229 = vmatpush1.msra.mxu0 0.0
    %230 = vmatprep.subr.mxu0 0.0
    %231 = vmatpush1.msra.mxu0 0.0
    %232 = vmatprep.subr.mxu0 0.0
    %233 = vmatpush1.msra.mxu0 0.0
    %234 = vmatprep.subr.mxu0 0.0
    %235 = vmatpush1.msra.mxu0 0.0
    %236 = vmatprep.subr.mxu0 0.0
    %237 = vmatpush1.msra.mxu0 0.0
    %238 = vmatprep.subr.mxu0 0.0
    %239 = vmatpush1.msra.mxu0 0.0
    %240 = vmatprep.subr.mxu0 0.0
    %241 = vmatpush1.msra.mxu0 0.0
    %242 = vmatprep.subr.mxu0 0.0
    %243 = vmatpush1.msra.mxu0 0.0
    %244 = vmatprep.subr.mxu0 0.0
    %245 = vmatpush1.msra.mxu0 0.0
    %246 = vmatprep.mubr.f32.mxu0 0.0
    %247 = vmatmul.mubr.f32.gmra.mrb[0].mxu0 %v175
    %v248 = vpop.f32.mrb[0].mxu0
    %v249 = vadd.f32 %v180, %v248
    %v250 = vpop.f32.mrb[0].mxu0
    %251 = vdwg.mxu0
    %v252 = vsub.f32 0.0, %v249
    %v253 = vmul.f32 %v252, 1.442695
    %v254 = vpow.pop %v253
    %v255 = vadd.f32 %v254, 1.0
    %v256 = vrcp.pop %v255
    %v257 = vmul.f32 1.0, %v256
    %258 = vst [vmem:[#allocation8] sm:$0xff] %v257
    // Predicated region
    $region34: #{tpu_custom_call.1} parent=1 // pred_check
      _
    $region35: #{tpu_custom_call.1} parent=1 // pred_check_branch
      %260 = sbr.rel (0) target = $region37
    $region36: #{tpu_custom_call.1} parent=1 // pred_region
      %s262 = ssub.s32 128, 128
      %263 = vsyncadd [#allocation4], %s262
      %s265 = sshll.u32 [#allocation8], 4
      %s266 = int_to_ptr.vmem [resolvable:$true] %s265
      %268 = dma.vmem_to_hbm [thread:$0]  %s266, 128, %s5, [#allocation4]
    $region37: #{tpu_custom_call.1} parent=1 // pred_fallthru
      _
    // Predicated region
    $region38: #{tpu_custom_call.1} parent=1 // pred_check
      _
    $region39: #{tpu_custom_call.1} parent=1 // pred_check_branch
      %270 = sbr.rel (0) target = $region41
    $region40: #{tpu_custom_call.1} parent=1 // pred_region
      %271 = dma.done [#allocation4], 128
    $region41: #{tpu_custom_call.1} parent=1 // pred_fallthru
      _
    %272 = vsyncpa [#allocation3], 1
    %273 = vsyncpa [#allocation6], 1
    %274 = vsyncpa [#allocation4], 1

</llo_original>
